<compile_context>
chip_gen: v6e
topology: v6e:2x2x1
jax: 0.10.0
libtpu: 0.0.40
codegen_flags: <defaults>
</compile_context>

<pallas_src>
import functools

import jax
import jax.numpy as jnp
from jax.experimental import pallas as pl
from jax.experimental.pallas import tpu as pltpu

_LANE = 128     # vreg lane width
_SUBLANE = 8    # f32 sublane granularity


def _round_up(x, m):
    return ((x + m - 1) // m) * m


def _device_kind():
    try:
        return jax.devices()[0].device_kind.lower()
    except Exception:
        return ""


def _tpu_generation_info():
    """Returns (physical_vmem_bytes, mxu_dim, multi_tensorcore_chip)."""
    phys = None
    try:
        phys = int(pltpu.get_tpu_info().vmem_capacity_bytes)
        if phys <= 0:
            phys = None
    except Exception:
        phys = None

    kind = _device_kind()
    if "v2" in kind or "v3" in kind:
        return (phys or (16 << 20)), 128, False
    if "v4" in kind or "v5" in kind:
        return (phys or (128 << 20)), 128, False
    if "v6" in kind:
        return (phys or (128 << 20)), 256, False
    # v7x or unknown: conservative VMEM, 256-wide MXU, 2 TCs/chip.
    return (phys or (64 << 20)), 256, True


def _pad_feature_dim(dim, mxu_dim):
    """128-lane padding; 256-aligned for wide dims on 256-wide MXU parts."""
    if dim <= _LANE:
        return _LANE
    if mxu_dim >= 256:
        return _round_up(dim, 256)
    return _round_up(dim, _LANE)


# ----------------------------------------------------------------------------
# Kernel: whole MLP fused.  rest = (w_ref_0, ..., w_ref_{L-1}, o_ref)
# ----------------------------------------------------------------------------
def _fused_mlp_kernel(x_ref, *rest, num_layers: int):
    w_refs = rest[:num_layers]
    o_ref = rest[num_layers]

    h = x_ref[...]                       # (tile_m, dim_in), native dtype
    if h.dtype != jnp.bfloat16:
        h = h.astype(jnp.bfloat16)       # in-kernel cast (hidden under DMA)

    acc = None
    for l in range(num_layers):
        # bf16 operands -> MXU, f32 accumulate.
        acc = jnp.dot(h, w_refs[l][...], preferred_element_type=jnp.float32)
        if l != num_layers - 1:
            # ReLU fused with the bf16 cast: keeps inter-layer activations bf16.
            h = jnp.maximum(acc, 0.0).astype(jnp.bfloat16)

    o_ref[...] = acc.astype(o_ref.dtype)


# ----------------------------------------------------------------------------
# Wrapper: builds the fused pallas_call (no input copy / no M padding),
# slices the padded output columns off.
# ----------------------------------------------------------------------------
def _fused_mlp_2d(x2d, weights_padded, dim_out):
    M, K = x2d.shape
    num_layers = len(weights_padded)
    N_pad = weights_padded[-1].shape[1]

    phys_vmem, _, multi_tc = _tpu_generation_info()
    budget = int(phys_vmem * 3 // 4)     # leave headroom below physical VMEM

    x_item = x2d.dtype.itemsize
    # Resident weights: default pipelining double-buffers them (see TODO above).
    weight_vmem = 2 * sum(int(w.size) * w.dtype.itemsize for w in weights_padded)
    max_feat = max([K] + [w.shape[1] for w in weights_padded])

    def footprint(t):
        return (2 * t * K * x_item            # input tile, double-buffered
                + 2 * t * N_pad * 4           # output tile (f32), double-buffered
                + weight_vmem                 # resident weights
                + 3 * t * max_feat * 4)       # activation temporaries headroom

    # Row tile: as big as the VMEM budget allows (amortizes per-step overhead),
    # bounded by the true row count, multiple of 8 sublanes.
    tile_target = 1024 if budget >= (96 << 20) else 512
    tile_m = min(tile_target, _round_up(M, _SUBLANE))
    while tile_m > 64 and footprint(tile_m) > budget:
        tile_m = _round_up(tile_m // 2, _SUBLANE)
    tile_m = max(tile_m, _SUBLANE)

    # Multi-TensorCore chips (v7x): make sure the "parallel" row axis has at
    # least 2 tiles so the second core gets work.
    if multi_tc and pl.cdiv(M, tile_m) == 1 and M > _SUBLANE:
        tile_m = max(_SUBLANE, _round_up(pl.cdiv(M, 2), _SUBLANE))

    grid = (pl.cdiv(M, tile_m),)   # last tile may be partial; rows independent

    kernel = functools.partial(_fused_mlp_kernel, num_layers=num_layers)

    # Input: last dim equals the full array dim (legal without 128 padding).
    in_specs = [pl.BlockSpec((tile_m, K), lambda i: (i, 0))]
    for w in weights_padded:
        # Constant index_map -> weight block fetched once, VMEM-resident
        # across all row tiles.
        in_specs.append(pl.BlockSpec(w.shape, lambda i: (0, 0)))
    out_spec = pl.BlockSpec((tile_m, N_pad), lambda i: (i, 0))

    flops = 2 * M * sum(w.shape[0] * w.shape[1] for w in weights_padded)
    bytes_accessed = (int(x2d.size) * x_item
                      + sum(int(w.size) * w.dtype.itemsize for w in weights_padded)
                      + M * N_pad * 4)

    vmem_limit = int(min(max(int(1.25 * footprint(tile_m)), 32 << 20), budget))

    out = pl.pallas_call(
        kernel,
        out_shape=jax.ShapeDtypeStruct((M, N_pad), jnp.float32),
        grid_spec=pltpu.PrefetchScalarGridSpec(
            num_scalar_prefetch=0,
            grid=grid,
            in_specs=in_specs,
            out_specs=out_spec,
        ),
        compiler_params=pltpu.CompilerParams(
            dimension_semantics=("parallel",),
            vmem_limit_bytes=vmem_limit),
        cost_estimate=pl.CostEstimate(
            flops=flops, transcendentals=0, bytes_accessed=bytes_accessed),
    )(x2d, *weights_padded)

    return out[:, :dim_out]


@functools.partial(jax.jit, static_argnames=("dim_in", "dim_out"))
def _mlp_forward(x, weights_padded, dim_in, dim_out):
    lead = x.shape[:-1]
    h = x.reshape((-1, dim_in))
    y = _fused_mlp_2d(h, weights_padded, dim_out)
    return y.reshape(lead + (dim_out,))


# ----------------------------------------------------------------------------
# Module mirroring the PyTorch MLP (num_layers bias-free Linears, ReLU between)
# ----------------------------------------------------------------------------
class MLPPallas:

    def __init__(self, dim_in, dim_out, dim_hidden, num_layers, key):
        self.dim_in = dim_in
        self.dim_out = dim_out
        self.dim_hidden = dim_hidden
        self.num_layers = num_layers

        _, mxu_dim, _ = _tpu_generation_info()

        self.weights_t = []       # unpadded f32 [in, out]  (reference)
        self.weights_padded = []  # feature-padded bf16 [K(_pad), N_pad]
        for l in range(num_layers):
            fan_in = dim_in if l == 0 else dim_hidden
            fan_out = dim_out if l == num_layers - 1 else dim_hidden
            key, sub = jax.random.split(key)
            # Same bound as PyTorch's default Linear init: U(-1/sqrt(in), 1/sqrt(in)).
            bound = 1.0 / float(fan_in) ** 0.5
            w = jax.random.uniform(sub, (fan_out, fan_in), dtype=jnp.float32,
                                   minval=-bound, maxval=bound)   # [out, in]
            w_t = jnp.transpose(w)                                # [in, out]
            self.weights_t.append(w_t)

            # Layer 0 keeps the true dim_in rows (input is fed unpadded);
            # deeper layers take the previous layer's padded width.
            k_rows = fan_in if l == 0 else _pad_feature_dim(dim_hidden, mxu_dim)
            n_cols = _pad_feature_dim(fan_out, mxu_dim)
            w_pad = jnp.zeros((k_rows, n_cols), jnp.bfloat16)
            w_pad = w_pad.at[:fan_in, :fan_out].set(w_t.astype(jnp.bfloat16))
            self.weights_padded.append(w_pad)

    def __call__(self, x):
        return _mlp_forward(x, tuple(self.weights_padded),
                            self.dim_in, self.dim_out)


# ----------------------------------------------------------------------------
# Pure-JAX reference matching the kernel's numerics (bf16 operands, f32 accum,
# bf16 inter-layer activations).
# ----------------------------------------------------------------------------
def _reference_forward(x, weights_t, num_layers, dim_out):
    lead = x.shape[:-1]
    h = x.reshape((-1, x.shape[-1])).astype(jnp.bfloat16)
    for l in range(num_layers):
        w_bf16 = weights_t[l].astype(jnp.bfloat16)
        acc = jnp.dot(h, w_bf16, preferred_element_type=jnp.float32)
        if l != num_layers - 1:
            h = jnp.maximum(acc, 0.0).astype(jnp.bfloat16)
    return acc.reshape(lead + (dim_out,))


if __name__ == "__main__":
    key = jax.random.PRNGKey(0)
    k_w, k_x = jax.random.split(key)

    dim_in, dim_out, dim_hidden, num_layers = 16, 8, 32, 3
    batch, npts = 2, 64  # small "points" batch, like a coords MLP input

    mlp = MLPPallas(dim_in, dim_out, dim_hidden, num_layers, k_w)
    x = jax.random.normal(k_x, (batch, npts, dim_in), dtype=jnp.float32)

    y = mlp(x)
    y = jax.block_until_ready(y)

    y_ref = _reference_forward(x, mlp.weights_t, num_layers, dim_out)
    assert y.shape == (batch, npts, dim_out)
    # Tolerance scaled for bf16-operand matmuls (grows ~sqrt(K)).
    tol = 1e-3 * max(1.0, float(max(dim_in, dim_hidden)) ** 0.5 / 8.0)
    assert jnp.allclose(y, y_ref, atol=tol, rtol=tol)

    print("KERNEL_OK")
</pallas_src>

<mosaic_0001>
module attributes {stable_mosaic.version = 11 : i64} {
  func.func @_fused_mlp_kernel(%arg0: i32, %arg1: memref<64x16xf32, #tpu.memory_space<vmem>>, %arg2: memref<16x128xbf16, #tpu.memory_space<vmem>>, %arg3: memref<128x128xbf16, #tpu.memory_space<vmem>>, %arg4: memref<128x128xbf16, #tpu.memory_space<vmem>>, %arg5: memref<64x128xf32, #tpu.memory_space<vmem>>) attributes {dimension_semantics = [#tpu.dimension_semantics<parallel>], iteration_bounds = array<i64: 2>, scalar_prefetch = 0 : i64, scratch_operands = 0 : i64, tpu.core_type = #tpu.core_type<tc>, window_params = [{transform_indices = @transform_0, window_bounds = array<i64: 64, 16>}, {pipeline_mode = #tpu.pipeline_mode<synchronous>, transform_indices = @transform_1, window_bounds = array<i64: 16, 128>}, {pipeline_mode = #tpu.pipeline_mode<synchronous>, transform_indices = @transform_2, window_bounds = array<i64: 128, 128>}, {pipeline_mode = #tpu.pipeline_mode<synchronous>, transform_indices = @transform_3, window_bounds = array<i64: 128, 128>}, {transform_indices = @transform_4, window_bounds = array<i64: 64, 128>}]} {
    %c0 = arith.constant 0 : index
    %c0_0 = arith.constant 0 : index
    %0 = vector.load %arg1[%c0, %c0_0] : memref<64x16xf32, #tpu.memory_space<vmem>>, vector<64x16xf32>
    %1 = arith.truncf %0 : vector<64x16xf32> to vector<64x16xbf16>
    %c0_1 = arith.constant 0 : index
    %c0_2 = arith.constant 0 : index
    %2 = vector.load %arg2[%c0_1, %c0_2] : memref<16x128xbf16, #tpu.memory_space<vmem>>, vector<16x128xbf16>
    %cst = arith.constant dense<0.000000e+00> : vector<64x128xf32>
    %3 = tpu.matmul %1, %2, %cst {dimension_numbers = #tpu.dot_dimension_numbers<[1], [0], [0], [1], [0, 0, 1, 1], [], []>} : vector<64x16xbf16>, vector<16x128xbf16>, vector<64x128xf32> -> vector<64x128xf32>
    %cst_3 = arith.constant 0.000000e+00 : f32
    %4 = vector.broadcast %cst_3 : f32 to vector<64x128xf32>
    %5 = arith.maximumf %3, %4 : vector<64x128xf32>
    %6 = arith.truncf %5 : vector<64x128xf32> to vector<64x128xbf16>
    %c0_4 = arith.constant 0 : index
    %c0_5 = arith.constant 0 : index
    %7 = vector.load %arg3[%c0_4, %c0_5] : memref<128x128xbf16, #tpu.memory_space<vmem>>, vector<128x128xbf16>
    %cst_6 = arith.constant dense<0.000000e+00> : vector<64x128xf32>
    %8 = tpu.matmul %6, %7, %cst_6 {dimension_numbers = #tpu.dot_dimension_numbers<[1], [0], [0], [1], [0, 0, 1, 1], [], []>} : vector<64x128xbf16>, vector<128x128xbf16>, vector<64x128xf32> -> vector<64x128xf32>
    %cst_7 = arith.constant 0.000000e+00 : f32
    %9 = vector.broadcast %cst_7 : f32 to vector<64x128xf32>
    %10 = arith.maximumf %8, %9 : vector<64x128xf32>
    %11 = arith.truncf %10 : vector<64x128xf32> to vector<64x128xbf16>
    %c0_8 = arith.constant 0 : index
    %c0_9 = arith.constant 0 : index
    %12 = vector.load %arg4[%c0_8, %c0_9] : memref<128x128xbf16, #tpu.memory_space<vmem>>, vector<128x128xbf16>
    %cst_10 = arith.constant dense<0.000000e+00> : vector<64x128xf32>
    %13 = tpu.matmul %11, %12, %cst_10 {dimension_numbers = #tpu.dot_dimension_numbers<[1], [0], [0], [1], [0, 0, 1, 1], [], []>} : vector<64x128xbf16>, vector<128x128xbf16>, vector<64x128xf32> -> vector<64x128xf32>
    %c0_11 = arith.constant 0 : index
    %c0_12 = arith.constant 0 : index
    %14 = vector.load %arg5[%c0_11, %c0_12] : memref<64x128xf32, #tpu.memory_space<vmem>>, vector<64x128xf32>
    tpu.vector_store %arg5[%c0_11, %c0_12], %13 {strides = array<i32>} : memref<64x128xf32, #tpu.memory_space<vmem>>, vector<64x128xf32>,
    return
  }
  func.func @transform_0(%arg0: i32) -> (i32, i32) {
    %c0_i32 = arith.constant 0 : i32
    %c0_i32_0 = arith.constant 0 : i32
    return %arg0, %c0_i32 : i32, i32
  }
  func.func @transform_1(%arg0: i32) -> (i32, i32) {
    %c0_i32 = arith.constant 0 : i32
    %c0_i32_0 = arith.constant 0 : i32
    %c0_i32_1 = arith.constant 0 : i32
    return %c0_i32, %c0_i32_0 : i32, i32
  }
  func.func @transform_2(%arg0: i32) -> (i32, i32) {
    %c0_i32 = arith.constant 0 : i32
    %c0_i32_0 = arith.constant 0 : i32
    %c0_i32_1 = arith.constant 0 : i32
    return %c0_i32, %c0_i32_0 : i32, i32
  }
  func.func @transform_3(%arg0: i32) -> (i32, i32) {
    %c0_i32 = arith.constant 0 : i32
    %c0_i32_0 = arith.constant 0 : i32
    %c0_i32_1 = arith.constant 0 : i32
    return %c0_i32, %c0_i32_0 : i32, i32
  }
  func.func @transform_4(%arg0: i32) -> (i32, i32) {
    %c0_i32 = arith.constant 0 : i32
    %c0_i32_0 = arith.constant 0 : i32
    return %arg0, %c0_i32 : i32, i32
  }
}

</mosaic_0001>

<llo_original>
// kernel: _mlp_forward.1
$region0: #{_mlp_forward.1}
  #allocation0 [shape = 'u32[]', space=smem, size = 0x4, offset = 0x4, fixed_abs, tag = 'smem constant byte address 0x4 - core index']
  #allocation1 [shape = 'u32[144,128]{1,0:T(1,128)}', space=vmem, size = 0x12000, scoped, tag = 'internal scratch']
  %s0 = inlined_call_operand.vmem [shape: f32[128,16], index: 0, kind: input, shape index: {}]
  %s1 = inlined_call_operand.vmem [shape: bf16[16,128], index: 1, kind: input, shape index: {}]
  %s2 = inlined_call_operand.vmem [shape: bf16[128,128], index: 2, kind: input, shape index: {}]
  %s3 = inlined_call_operand.vmem [shape: bf16[128,128], index: 3, kind: input, shape index: {}]
  %s4 = inlined_call_operand.vmem [shape: f32[128,128], index: 4, kind: output, shape index: {}]
  %s5 = sld [smem:[#allocation0]]
  $region49: #{_mlp_forward.1} parent=0
    _
  %s7 = ssub.s32 1, %s5
  %s8 = scalar_select 0, %s7, %s5
  loop: start=0, step=1, limit=4
  $region2: #{_mlp_forward.1} parent=0 // loop_pre_header
    _
  $region3: #{_mlp_forward.1} parent=0 // loop_header
    %s10 = sphi 0, %s14
    %p11 = scmp.ge.s32.totalorder %s10, 4
    %s20 = sphi 0, %s22
    %s23 = sphi 0, %s20
    %s24 = sphi 0, %s23
    %s40 = sphi 0, %s24
    %s44 = sphi 0, %s44
    %s46 = sphi 0, %s44
    %s47 = sphi 0, %s46
    %s61 = sphi 0, %s47
    %s65 = sphi 0, %s65
    %s67 = sphi 0, %s65
    %s68 = sphi 0, %s67
    %s82 = sphi 0, %s68
    %s86 = sphi 0, %s86
    %s88 = sphi 0, %s86
    %s89 = sphi 0, %s88
    %s103 = sphi 0, %s89
    %s109 = sphi 0, %s111
    %s112 = sphi 0, %s109
    %s113 = sphi 0, %s112
    %s129 = sphi 0, %s113
  $region4: #{_mlp_forward.1} parent=0 // loop_header_branch
    %13 = sbr.rel (%p11) target = $region8
  $region5: #{_mlp_forward.1} parent=0 // loop_body
    %s15 = ssub.s32 %s10, 1
    %s16 = ssub.s32 %s10, 2
    %s17 = sadd.s32 %s10, 1
    %s18 = ssub.s32 %s10, %s17
    %p19 = scmp.eq.s32.totalorder %s18, 0
    %s21 = sadd.s32 %s20, 1
    %s22 = scalar_select %p19, %s20, %s21
    %p25 = pneg %p19
    %p26 = scmp.eq.s32.totalorder %s10, 1
    %p27 = por %p25, %p26
    %p28 = scmp.ne.s32.totalorder %s20, %s23
    %p29 = scmp.eq.s32.totalorder %s10, 0
    %p30 = por %p28, %p29
    %p31 = scmp.ne.s32.totalorder %s20, %s23
    %p32 = scmp.eq.s32.totalorder %s15, 1
    %p33 = por %p31, %p32
    %p34 = scmp.ne.s32.totalorder %s23, %s24
    %p35 = scmp.eq.s32.totalorder %s15, 0
    %p36 = por %p34, %p35
    %p37 = scmp.ne.s32.totalorder %s23, %s24
    %p38 = scmp.eq.s32.totalorder %s16, 1
    %p39 = por %p37, %p38
    %p41 = scmp.ne.s32.totalorder %s24, %s40
    %p42 = scmp.eq.s32.totalorder %s16, 0
    %p43 = por %p41, %p42
    %s45 = sadd.s32 %s44, 1
    %p48 = scmp.eq.s32.totalorder %s10, 1
    %p49 = scmp.ne.s32.totalorder %s44, %s46
    %p50 = scmp.eq.s32.totalorder %s10, 0
    %p51 = por %p49, %p50
    %p52 = scmp.ne.s32.totalorder %s44, %s46
    %p53 = scmp.eq.s32.totalorder %s15, 1
    %p54 = por %p52, %p53
    %p55 = scmp.ne.s32.totalorder %s46, %s47
    %p56 = scmp.eq.s32.totalorder %s15, 0
    %p57 = por %p55, %p56
    %p58 = scmp.ne.s32.totalorder %s46, %s47
    %p59 = scmp.eq.s32.totalorder %s16, 1
    %p60 = por %p58, %p59
    %p62 = scmp.ne.s32.totalorder %s47, %s61
    %p63 = scmp.eq.s32.totalorder %s16, 0
    %p64 = por %p62, %p63
    %s66 = sadd.s32 %s65, 1
    %p69 = scmp.eq.s32.totalorder %s10, 1
    %p70 = scmp.ne.s32.totalorder %s65, %s67
    %p71 = scmp.eq.s32.totalorder %s10, 0
    %p72 = por %p70, %p71
    %p73 = scmp.ne.s32.totalorder %s65, %s67
    %p74 = scmp.eq.s32.totalorder %s15, 1
    %p75 = por %p73, %p74
    %p76 = scmp.ne.s32.totalorder %s67, %s68
    %p77 = scmp.eq.s32.totalorder %s15, 0
    %p78 = por %p76, %p77
    %p79 = scmp.ne.s32.totalorder %s67, %s68
    %p80 = scmp.eq.s32.totalorder %s16, 1
    %p81 = por %p79, %p80
    %p83 = scmp.ne.s32.totalorder %s68, %s82
    %p84 = scmp.eq.s32.totalorder %s16, 0
    %p85 = por %p83, %p84
    %s87 = sadd.s32 %s86, 1
    %p90 = scmp.eq.s32.totalorder %s10, 1
    %p91 = scmp.ne.s32.totalorder %s86, %s88
    %p92 = scmp.eq.s32.totalorder %s10, 0
    %p93 = por %p91, %p92
    %p94 = scmp.ne.s32.totalorder %s86, %s88
    %p95 = scmp.eq.s32.totalorder %s15, 1
    %p96 = por %p94, %p95
    %p97 = scmp.ne.s32.totalorder %s88, %s89
    %p98 = scmp.eq.s32.totalorder %s15, 0
    %p99 = por %p97, %p98
    %p100 = scmp.ne.s32.totalorder %s88, %s89
    %p101 = scmp.eq.s32.totalorder %s16, 1
    %p102 = por %p100, %p101
    %p104 = scmp.ne.s32.totalorder %s89, %s103
    %p105 = scmp.eq.s32.totalorder %s16, 0
    %p106 = por %p104, %p105
    %s107 = ssub.s32 %s10, %s17
    %p108 = scmp.eq.s32.totalorder %s107, 0
    %s110 = sadd.s32 %s109, 1
    %s111 = scalar_select %p108, %s109, %s110
    %p114 = pneg %p108
    %p115 = scmp.eq.s32.totalorder %s10, 1
    %p116 = por %p114, %p115
    %p117 = scmp.ne.s32.totalorder %s109, %s112
    %p118 = scmp.eq.s32.totalorder %s10, 0
    %p119 = por %p117, %p118
    %p120 = scmp.ne.s32.totalorder %s109, %s112
    %p121 = scmp.eq.s32.totalorder %s15, 1
    %p122 = por %p120, %p121
    %p123 = scmp.ne.s32.totalorder %s112, %s113
    %p124 = scmp.eq.s32.totalorder %s15, 0
    %p125 = por %p123, %p124
    %p126 = scmp.ne.s32.totalorder %s112, %s113
    %p127 = scmp.eq.s32.totalorder %s16, 1
    %p128 = por %p126, %p127
    %p130 = scmp.ne.s32.totalorder %s113, %s129
    %p131 = scmp.eq.s32.totalorder %s16, 0
    %p132 = por %p130, %p131
    %p133 = scmp.le.s32.totalorder 1, %s10
    %p134 = scmp.lt.s32.totalorder %s10, 3
    %p135 = pnand %p133, %p134
    %p136 = pneg %p135
    // Predicated region
    $region9: #{_mlp_forward.1} parent=5 // pred_check
      _
    $region10: #{_mlp_forward.1} parent=5 // pred_check_branch
      %138 = sbr.rel (%p135) target = $region12
    $region11: #{_mlp_forward.1} parent=5 // pred_region
      %s139 = ssub.s32 %s10, 1
      // Predicated region
      $region13: #{_mlp_forward.1} parent=11 // pred_check
        %p140 = pneg %p57
      $region14: #{_mlp_forward.1} parent=11 // pred_check_branch
        %142 = sbr.rel (%p140) target = $region16
      $region15: #{_mlp_forward.1} parent=11 // pred_region
        _
      $region16: #{_mlp_forward.1} parent=11 // pred_fallthru
        _
      // Predicated region
      $region17: #{_mlp_forward.1} parent=11 // pred_check
        %p143 = pneg %p78
      $region18: #{_mlp_forward.1} parent=11 // pred_check_branch
        %145 = sbr.rel (%p143) target = $region20
      $region19: #{_mlp_forward.1} parent=11 // pred_region
        _
      $region20: #{_mlp_forward.1} parent=11 // pred_fallthru
        _
      // Predicated region
      $region21: #{_mlp_forward.1} parent=11 // pred_check
        %p146 = pneg %p99
      $region22: #{_mlp_forward.1} parent=11 // pred_check_branch
        %148 = sbr.rel (%p146) target = $region24
      $region23: #{_mlp_forward.1} parent=11 // pred_region
        _
      $region24: #{_mlp_forward.1} parent=11 // pred_fallthru
        _
    $region12: #{_mlp_forward.1} parent=5 // pred_fallthru
      _
    %p149 = scmp.lt.s32.totalorder %s10, 2
    // Predicated region
    $region25: #{_mlp_forward.1} parent=5 // pred_check
      %p150 = pneg %p149
    $region26: #{_mlp_forward.1} parent=5 // pred_check_branch
      %152 = sbr.rel (%p150) target = $region28
    $region27: #{_mlp_forward.1} parent=5 // pred_region
      // Predicated region
      $region29: #{_mlp_forward.1} parent=27 // pred_check
        %p153 = pneg %p30
      $region30: #{_mlp_forward.1} parent=27 // pred_check_branch
        %155 = sbr.rel (%p153) target = $region32
      $region31: #{_mlp_forward.1} parent=27 // pred_region
        %s156 = smul.u32 8, %s10
        %p157 = scmp.lt.s32.totalorder %s156, 15
        %s158 = scalar_select %p157, %s156, 15
        %s159 = smul.addr %s158, 8
        %s160 = scalar_lea.vmem %s0, %s159
        %s161 = smul.u32 8, %s10
      $region32: #{_mlp_forward.1} parent=27 // pred_fallthru
        _
    $region28: #{_mlp_forward.1} parent=5 // pred_fallthru
      _
    %p162 = scmp.le.s32.totalorder 1, %s10
    %p163 = scmp.lt.s32.totalorder %s10, 3
    %p164 = pnand %p162, %p163
    %p165 = pneg %p164
    // Predicated region
    $region33: #{_mlp_forward.1} parent=5 // pred_check
      _
    $region34: #{_mlp_forward.1} parent=5 // pred_check_branch
      %167 = sbr.rel (%p164) target = $region36
    $region35: #{_mlp_forward.1} parent=5 // pred_region
      %s168 = ssub.s32 %s10, 1
      %s169 = smul.u32 8, %s15
      %p170 = scmp.lt.s32.totalorder %s169, 15
      %s171 = scalar_select %p170, %s169, 15
      %s172 = smul.addr %s171, 8
      %s173 = scalar_lea.vmem %s0, %s172
      %p174 = pneg %p36
      %p175 = pneg %p33
      %p176 = pneg %p57
      %p177 = pneg %p54
      %p178 = pneg %p78
      %p179 = pneg %p75
      %p180 = pneg %p99
      %p181 = pneg %p96
      %p182 = pneg %p125
      %p183 = pneg %p122
      %s184 = smul.u32 8, %s15
      %p185 = scmp.lt.s32.totalorder %s184, 15
      %s186 = scalar_select %p185, %s184, 15
      %s187 = smul.addr %s186, 8
      %s188 = scalar_lea.vmem %s4, %s187
      %s189 = smul.u32 8, %s15
      %p190 = scmp.lt.s32.totalorder %s189, 15
      %s191 = scalar_select %p190, %s189, 15
      %s192 = smul.addr %s191, 8
      %s193 = scalar_lea.vmem %s0, %s192
      %s194 = smul.u32 8, %s15
      %s195 = smul.u32 8, %s15
      %p196 = scmp.lt.s32.totalorder %s195, 15
      %s197 = scalar_select %p196, %s195, 15
      %s198 = smul.addr %s197, 8
      %s199 = scalar_lea.vmem %s4, %s198
      %s200 = smul.u32 8, %s15
      %v202 = vld [vmem:[%s193] sm:$0xff]
      %v203 = vld [vmem:[%s193 + $0x8] sm:$0xff]
      %v204 = vld [vmem:[%s193 + $0x10] sm:$0xff]
      %v205 = vld [vmem:[%s193 + $0x18] sm:$0xff]
      %v206 = vld [vmem:[%s193 + $0x20] sm:$0xff]
      %v207 = vld [vmem:[%s193 + $0x28] sm:$0xff]
      %v208 = vld [vmem:[%s193 + $0x30] sm:$0xff]
      %v209 = vld [vmem:[%s193 + $0x38] sm:$0xff]
      %v210 = vpack.c.bf16 %v203, %v202
      %v211 = vpack.c.bf16 %v205, %v204
      %v212 = vpack.c.bf16 %v207, %v206
      %v213 = vpack.c.bf16 %v209, %v208
      %v214 = vld [vmem:[%s1] sm:$0xf]
      %v215 = vld [vmem:[%s1 + $0x4] sm:$0xf]
      %v218 = vunpack.c.l.b16 %v214
      %v219 = vunpack.c.l.b16 %v215
      %v220 = vpack.c.b16 %v219, %v218
      %vm222 = vcmask 130048
      %v224 = vsel %vm222, %v210, 0
      %v227 = vsel %vm222, %v211, 0
      %v230 = vsel %vm222, %v212, 0
      %v233 = vsel %vm222, %v213, 0
      %235 = vmatprep.subr.bf16.mxu0 0
      %236 = vmatpush1.bf16.msra.mxu0 0
      %237 = vmatprep.subr.bf16.mxu0 0
      %238 = vmatpush1.bf16.msra.mxu0 0
      %239 = vmatprep.subr.bf16.mxu0 0
      %240 = vmatpush1.bf16.msra.mxu0 0
      %241 = vmatprep.subr.bf16.mxu0 0
      %242 = vmatpush1.bf16.msra.mxu0 0
      %243 = vmatprep.subr.bf16.mxu0 0
      %244 = vmatpush1.bf16.msra.mxu0 0
      %245 = vmatprep.subr.bf16.mxu0 0
      %246 = vmatpush1.bf16.msra.mxu0 0
      %247 = vmatprep.subr.bf16.mxu0 0
      %248 = vmatpush1.bf16.msra.mxu0 0
      %249 = vmatprep.subr.bf16.mxu0 0
      %250 = vmatpush1.bf16.msra.mxu0 %v220
      %251 = vmatprep.subr.bf16.mxu0 0
      %252 = vmatpush2.bf16.msra.mxu0 0
      %253 = vmatprep.subr.bf16.mxu0 0
      %254 = vmatpush2.bf16.msra.mxu0 0
      %255 = vmatprep.subr.bf16.mxu0 0
      %256 = vmatpush2.bf16.msra.mxu0 0
      %257 = vmatprep.subr.bf16.mxu0 0
      %258 = vmatpush2.bf16.msra.mxu0 0
      %259 = vmatprep.subr.bf16.mxu0 0
      %260 = vmatpush2.bf16.msra.mxu0 0
      %261 = vmatprep.subr.bf16.mxu0 0
      %262 = vmatpush2.bf16.msra.mxu0 0
      %263 = vmatprep.subr.bf16.mxu0 0
      %264 = vmatpush2.bf16.msra.mxu0 0
      %265 = vmatprep.subr.bf16.mxu0 0
      %266 = vmatpush2.bf16.msra.mxu0 0
      %267 = vmatprep.mubr.bf16.mxu0 0
      %268 = vmatmul.mubr.bf16.gmra.mxu0 %v224
      %v269 = vpop.f32.mrf.mxu0
      %v270 = vadd.f32 0.0, %v269
      %v271 = vpop.f32.mrf.mxu0
      %v272 = vpop.f32.mrf.mxu0
      %v273 = vadd.f32 0.0, %v272
      %v274 = vpop.f32.mrf.mxu0
      %275 = vmatprep.mubr.bf16.mxu0 0
      %276 = vmatmul.mubr.bf16.gmra.mxu0 %v227
      %v277 = vpop.f32.mrf.mxu0
      %v278 = vadd.f32 0.0, %v277
      %v279 = vpop.f32.mrf.mxu0
      %v280 = vpop.f32.mrf.mxu0
      %v281 = vadd.f32 0.0, %v280
      %v282 = vpop.f32.mrf.mxu0
      %283 = vmatprep.mubr.bf16.mxu0 0
      %284 = vmatmul.mubr.bf16.gmra.mxu0 %v230
      %v285 = vpop.f32.mrf.mxu0
      %v286 = vadd.f32 0.0, %v285
      %v287 = vpop.f32.mrf.mxu0
      %v288 = vpop.f32.mrf.mxu0
      %v289 = vadd.f32 0.0, %v288
      %v290 = vpop.f32.mrf.mxu0
      %291 = vmatprep.mubr.bf16.mxu0 0
      %292 = vmatmul.mubr.bf16.gmra.mxu0 %v233
      %v293 = vpop.f32.mrf.mxu0
      %v294 = vadd.f32 0.0, %v293
      %v295 = vpop.f32.mrf.mxu0
      %v296 = vpop.f32.mrf.mxu0
      %v297 = vadd.f32 0.0, %v296
      %v298 = vpop.f32.mrf.mxu0
      %299 = vdwg.mxu0
      %v300 = vmax.f32 %v270, 0.0
      %v301 = vmax.f32 %v273, 0.0
      %v302 = vmax.f32 %v278, 0.0
      %v303 = vmax.f32 %v281, 0.0
      %v304 = vmax.f32 %v286, 0.0
      %v305 = vmax.f32 %v289, 0.0
      %v306 = vmax.f32 %v294, 0.0
      %v307 = vmax.f32 %v297, 0.0
      %v308 = vpack.c.bf16 %v301, %v300
      %v309 = vpack.c.bf16 %v303, %v302
      %v310 = vpack.c.bf16 %v305, %v304
      %v311 = vpack.c.bf16 %v307, %v306
      %v312 = vld [vmem:[%s2] sm:$0xf]
      %v313 = vld [vmem:[%s2 + $0x4] sm:$0xf]
      %v314 = vld [vmem:[%s2 + $0x8] sm:$0xf]
      %v315 = vld [vmem:[%s2 + $0xc] sm:$0xf]
      %v316 = vld [vmem:[%s2 + $0x10] sm:$0xf]
      %v317 = vld [vmem:[%s2 + $0x14] sm:$0xf]
      %v318 = vld [vmem:[%s2 + $0x18] sm:$0xf]
      %v319 = vld [vmem:[%s2 + $0x1c] sm:$0xf]
      %v320 = vld [vmem:[%s2 + $0x20] sm:$0xf]
      %v321 = vld [vmem:[%s2 + $0x24] sm:$0xf]
      %v322 = vld [vmem:[%s2 + $0x28] sm:$0xf]
      %v323 = vld [vmem:[%s2 + $0x2c] sm:$0xf]
      %v324 = vld [vmem:[%s2 + $0x30] sm:$0xf]
      %v325 = vld [vmem:[%s2 + $0x34] sm:$0xf]
      %v326 = vld [vmem:[%s2 + $0x38] sm:$0xf]
      %v327 = vld [vmem:[%s2 + $0x3c] sm:$0xf]
      %v344 = vunpack.c.l.b16 %v312
      %v345 = vunpack.c.l.b16 %v313
      %v346 = vunpack.c.l.b16 %v314
      %v347 = vunpack.c.l.b16 %v315
      %v348 = vunpack.c.l.b16 %v316
      %v349 = vunpack.c.l.b16 %v317
      %v350 = vunpack.c.l.b16 %v318
      %v351 = vunpack.c.l.b16 %v319
      %v352 = vunpack.c.l.b16 %v320
      %v353 = vunpack.c.l.b16 %v321
      %v354 = vunpack.c.l.b16 %v322
      %v355 = vunpack.c.l.b16 %v323
      %v356 = vunpack.c.l.b16 %v324
      %v357 = vunpack.c.l.b16 %v325
      %v358 = vunpack.c.l.b16 %v326
      %v359 = vunpack.c.l.b16 %v327
      %v360 = vpack.c.b16 %v345, %v344
      %v361 = vpack.c.b16 %v347, %v346
      %v362 = vpack.c.b16 %v349, %v348
      %v363 = vpack.c.b16 %v351, %v350
      %v364 = vpack.c.b16 %v353, %v352
      %v365 = vpack.c.b16 %v355, %v354
      %v366 = vpack.c.b16 %v357, %v356
      %v367 = vpack.c.b16 %v359, %v358
      %376 = vmatprep.subr.bf16.mxu0 0
      %377 = vmatpush1.bf16.msra.mxu0 %v367
      %378 = vmatprep.subr.bf16.mxu0 0
      %379 = vmatpush1.bf16.msra.mxu0 %v366
      %380 = vmatprep.subr.bf16.mxu0 0
      %381 = vmatpush1.bf16.msra.mxu0 %v365
      %382 = vmatprep.subr.bf16.mxu0 0
      %383 = vmatpush1.bf16.msra.mxu0 %v364
      %384 = vmatprep.subr.bf16.mxu0 0
      %385 = vmatpush1.bf16.msra.mxu0 %v363
      %386 = vmatprep.subr.bf16.mxu0 0
      %387 = vmatpush1.bf16.msra.mxu0 %v362
      %388 = vmatprep.subr.bf16.mxu0 0
      %389 = vmatpush1.bf16.msra.mxu0 %v361
      %390 = vmatprep.subr.bf16.mxu0 0
      %391 = vmatpush1.bf16.msra.mxu0 %v360
      %392 = vmatprep.subr.bf16.mxu0 0
      %393 = vmatpush2.bf16.msra.mxu0 0
      %394 = vmatprep.subr.bf16.mxu0 0
      %395 = vmatpush2.bf16.msra.mxu0 0
      %396 = vmatprep.subr.bf16.mxu0 0
      %397 = vmatpush2.bf16.msra.mxu0 0
      %398 = vmatprep.subr.bf16.mxu0 0
      %399 = vmatpush2.bf16.msra.mxu0 0
      %400 = vmatprep.subr.bf16.mxu0 0
      %401 = vmatpush2.bf16.msra.mxu0 0
      %402 = vmatprep.subr.bf16.mxu0 0
      %403 = vmatpush2.bf16.msra.mxu0 0
      %404 = vmatprep.subr.bf16.mxu0 0
      %405 = vmatpush2.bf16.msra.mxu0 0
      %406 = vmatprep.subr.bf16.mxu0 0
      %407 = vmatpush2.bf16.msra.mxu0 0
      %408 = vmatprep.mubr.bf16.mxu0 0
      %409 = vmatmul.mubr.bf16.gmra.mxu0 %v308
      %v410 = vpop.f32.mrf.mxu0
      %v411 = vadd.f32 0.0, %v410
      %v412 = vpop.f32.mrf.mxu0
      %v413 = vpop.f32.mrf.mxu0
      %v414 = vadd.f32 0.0, %v413
      %v415 = vpop.f32.mrf.mxu0
      %416 = vmatprep.mubr.bf16.mxu0 0
      %417 = vmatmul.mubr.bf16.gmra.mxu0 %v309
      %v418 = vpop.f32.mrf.mxu0
      %v419 = vadd.f32 0.0, %v418
      %v420 = vpop.f32.mrf.mxu0
      %v421 = vpop.f32.mrf.mxu0
      %v422 = vadd.f32 0.0, %v421
      %v423 = vpop.f32.mrf.mxu0
      %424 = vmatprep.mubr.bf16.mxu0 0
      %425 = vmatmul.mubr.bf16.gmra.mxu0 %v310
      %v426 = vpop.f32.mrf.mxu0
      %v427 = vadd.f32 0.0, %v426
      %v428 = vpop.f32.mrf.mxu0
      %v429 = vpop.f32.mrf.mxu0
      %v430 = vadd.f32 0.0, %v429
      %v431 = vpop.f32.mrf.mxu0
      %432 = vmatprep.mubr.bf16.mxu0 0
      %433 = vmatmul.mubr.bf16.gmra.mxu0 %v311
      %v434 = vpop.f32.mrf.mxu0
      %v435 = vadd.f32 0.0, %v434
      %v436 = vpop.f32.mrf.mxu0
      %v437 = vpop.f32.mrf.mxu0
      %v438 = vadd.f32 0.0, %v437
      %v439 = vpop.f32.mrf.mxu0
      %440 = vdwg.mxu0
      %v441 = vmax.f32 %v411, 0.0
      %v442 = vmax.f32 %v414, 0.0
      %v443 = vmax.f32 %v419, 0.0
      %v444 = vmax.f32 %v422, 0.0
      %v445 = vmax.f32 %v427, 0.0
      %v446 = vmax.f32 %v430, 0.0
      %v447 = vmax.f32 %v435, 0.0
      %v448 = vmax.f32 %v438, 0.0
      %v449 = vpack.c.bf16 %v442, %v441
      %v450 = vpack.c.bf16 %v444, %v443
      %v451 = vpack.c.bf16 %v446, %v445
      %v452 = vpack.c.bf16 %v448, %v447
      %v453 = vld [vmem:[%s3] sm:$0xf]
      %v454 = vld [vmem:[%s3 + $0x4] sm:$0xf]
      %v455 = vld [vmem:[%s3 + $0x8] sm:$0xf]
      %v456 = vld [vmem:[%s3 + $0xc] sm:$0xf]
      %v457 = vld [vmem:[%s3 + $0x10] sm:$0xf]
      %v458 = vld [vmem:[%s3 + $0x14] sm:$0xf]
      %v459 = vld [vmem:[%s3 + $0x18] sm:$0xf]
      %v460 = vld [vmem:[%s3 + $0x1c] sm:$0xf]
      %v461 = vld [vmem:[%s3 + $0x20] sm:$0xf]
      %v462 = vld [vmem:[%s3 + $0x24] sm:$0xf]
      %v463 = vld [vmem:[%s3 + $0x28] sm:$0xf]
      %v464 = vld [vmem:[%s3 + $0x2c] sm:$0xf]
      %v465 = vld [vmem:[%s3 + $0x30] sm:$0xf]
      %v466 = vld [vmem:[%s3 + $0x34] sm:$0xf]
      %v467 = vld [vmem:[%s3 + $0x38] sm:$0xf]
      %v468 = vld [vmem:[%s3 + $0x3c] sm:$0xf]
      %v485 = vunpack.c.l.b16 %v453
      %v486 = vunpack.c.l.b16 %v454
      %v487 = vunpack.c.l.b16 %v455
      %v488 = vunpack.c.l.b16 %v456
      %v489 = vunpack.c.l.b16 %v457
      %v490 = vunpack.c.l.b16 %v458
      %v491 = vunpack.c.l.b16 %v459
      %v492 = vunpack.c.l.b16 %v460
      %v493 = vunpack.c.l.b16 %v461
      %v494 = vunpack.c.l.b16 %v462
      %v495 = vunpack.c.l.b16 %v463
      %v496 = vunpack.c.l.b16 %v464
      %v497 = vunpack.c.l.b16 %v465
      %v498 = vunpack.c.l.b16 %v466
      %v499 = vunpack.c.l.b16 %v467
      %v500 = vunpack.c.l.b16 %v468
      %v501 = vpack.c.b16 %v486, %v485
      %v502 = vpack.c.b16 %v488, %v487
      %v503 = vpack.c.b16 %v490, %v489
      %v504 = vpack.c.b16 %v492, %v491
      %v505 = vpack.c.b16 %v494, %v493
      %v506 = vpack.c.b16 %v496, %v495
      %v507 = vpack.c.b16 %v498, %v497
      %v508 = vpack.c.b16 %v500, %v499
      %517 = vmatprep.subr.bf16.mxu0 0
      %518 = vmatpush1.bf16.msra.mxu0 %v508
      %519 = vmatprep.subr.bf16.mxu0 0
      %520 = vmatpush1.bf16.msra.mxu0 %v507
      %521 = vmatprep.subr.bf16.mxu0 0
      %522 = vmatpush1.bf16.msra.mxu0 %v506
      %523 = vmatprep.subr.bf16.mxu0 0
      %524 = vmatpush1.bf16.msra.mxu0 %v505
      %525 = vmatprep.subr.bf16.mxu0 0
      %526 = vmatpush1.bf16.msra.mxu0 %v504
      %527 = vmatprep.subr.bf16.mxu0 0
      %528 = vmatpush1.bf16.msra.mxu0 %v503
      %529 = vmatprep.subr.bf16.mxu0 0
      %530 = vmatpush1.bf16.msra.mxu0 %v502
      %531 = vmatprep.subr.bf16.mxu0 0
      %532 = vmatpush1.bf16.msra.mxu0 %v501
      %533 = vmatprep.subr.bf16.mxu0 0
      %534 = vmatpush2.bf16.msra.mxu0 0
      %535 = vmatprep.subr.bf16.mxu0 0
      %536 = vmatpush2.bf16.msra.mxu0 0
      %537 = vmatprep.subr.bf16.mxu0 0
      %538 = vmatpush2.bf16.msra.mxu0 0
      %539 = vmatprep.subr.bf16.mxu0 0
      %540 = vmatpush2.bf16.msra.mxu0 0
      %541 = vmatprep.subr.bf16.mxu0 0
      %542 = vmatpush2.bf16.msra.mxu0 0
      %543 = vmatprep.subr.bf16.mxu0 0
      %544 = vmatpush2.bf16.msra.mxu0 0
      %545 = vmatprep.subr.bf16.mxu0 0
      %546 = vmatpush2.bf16.msra.mxu0 0
      %547 = vmatprep.subr.bf16.mxu0 0
      %548 = vmatpush2.bf16.msra.mxu0 0
      %549 = vmatprep.mubr.bf16.mxu0 0
      %550 = vmatmul.mubr.bf16.gmra.mxu0 %v449
      %v551 = vpop.f32.mrf.mxu0
      %v552 = vadd.f32 0.0, %v551
      %v553 = vpop.f32.mrf.mxu0
      %v554 = vpop.f32.mrf.mxu0
      %v555 = vadd.f32 0.0, %v554
      %v556 = vpop.f32.mrf.mxu0
      %557 = vmatprep.mubr.bf16.mxu0 0
      %558 = vmatmul.mubr.bf16.gmra.mxu0 %v450
      %v559 = vpop.f32.mrf.mxu0
      %v560 = vadd.f32 0.0, %v559
      %v561 = vpop.f32.mrf.mxu0
      %v562 = vpop.f32.mrf.mxu0
      %v563 = vadd.f32 0.0, %v562
      %v564 = vpop.f32.mrf.mxu0
      %565 = vmatprep.mubr.bf16.mxu0 0
      %566 = vmatmul.mubr.bf16.gmra.mxu0 %v451
      %v567 = vpop.f32.mrf.mxu0
      %v568 = vadd.f32 0.0, %v567
      %v569 = vpop.f32.mrf.mxu0
      %v570 = vpop.f32.mrf.mxu0
      %v571 = vadd.f32 0.0, %v570
      %v572 = vpop.f32.mrf.mxu0
      %573 = vmatprep.mubr.bf16.mxu0 0
      %574 = vmatmul.mubr.bf16.gmra.mxu0 %v452
      %v575 = vpop.f32.mrf.mxu0
      %v576 = vadd.f32 0.0, %v575
      %v577 = vpop.f32.mrf.mxu0
      %v578 = vpop.f32.mrf.mxu0
      %v579 = vadd.f32 0.0, %v578
      %v580 = vpop.f32.mrf.mxu0
      %581 = vdwg.mxu0
      %582 = vst [vmem:[%s199] sm:$0xff] %v552
      %583 = vst [vmem:[%s199 + $0x8] sm:$0xff] %v555
      %584 = vst [vmem:[%s199 + $0x10] sm:$0xff] %v560
      %585 = vst [vmem:[%s199 + $0x18] sm:$0xff] %v563
      %586 = vst [vmem:[%s199 + $0x20] sm:$0xff] %v568
      %587 = vst [vmem:[%s199 + $0x28] sm:$0xff] %v571
      %588 = vst [vmem:[%s199 + $0x30] sm:$0xff] %v576
      %589 = vst [vmem:[%s199 + $0x38] sm:$0xff] %v579
      %s590 = smul.u32 8, %s15
      %p591 = scmp.lt.s32.totalorder %s590, 15
      %s592 = scalar_select %p591, %s590, 15
      %s593 = smul.addr %s592, 8
      %s594 = scalar_lea.vmem %s4, %s593
      // Predicated region
      $region37: #{_mlp_forward.1} parent=35 // pred_check
        %p595 = pneg %p122
      $region38: #{_mlp_forward.1} parent=35 // pred_check_branch
        %597 = sbr.rel (%p595) target = $region40
      $region39: #{_mlp_forward.1} parent=35 // pred_region
        %s598 = smul.u32 8, %s15
      $region40: #{_mlp_forward.1} parent=35 // pred_fallthru
        _
    $region36: #{_mlp_forward.1} parent=5 // pred_fallthru
      _
    %p599 = scmp.le.s32.totalorder 2, %s10
    // Predicated region
    $region41: #{_mlp_forward.1} parent=5 // pred_check
      %p600 = pneg %p599
    $region42: #{_mlp_forward.1} parent=5 // pred_check_branch
      %602 = sbr.rel (%p600) target = $region44
    $region43: #{_mlp_forward.1} parent=5 // pred_region
      %s603 = ssub.s32 %s10, 2
      // Predicated region
      $region45: #{_mlp_forward.1} parent=43 // pred_check
        %p604 = pneg %p128
      $region46: #{_mlp_forward.1} parent=43 // pred_check_branch
        %606 = sbr.rel (%p604) target = $region48
      $region47: #{_mlp_forward.1} parent=43 // pred_region
        %s607 = smul.u32 8, %s16
        %p608 = scmp.lt.s32.totalorder %s607, 15
        %s609 = scalar_select %p608, %s607, 15
        %s610 = smul.addr %s609, 8
        %s611 = scalar_lea.vmem %s4, %s610
      $region48: #{_mlp_forward.1} parent=43 // pred_fallthru
        _
    $region44: #{_mlp_forward.1} parent=5 // pred_fallthru
      _
  $region6: #{_mlp_forward.1} parent=0 // loop_footer
    %s14 = sadd.s32 1, %s10
  $region7: #{_mlp_forward.1} parent=0 // loop_footer_branch
    %9 = sbr.rel target = $region3
  $region8: #{_mlp_forward.1} parent=0 // loop_exit
    _

</llo_original>
